<compile_context>
chip_gen: v7x
topology: tpu7x:2x2x1
jax: 0.10.0
libtpu: 0.0.40
codegen_flags: <defaults>
</compile_context>

<pallas_src>
import jax
import jax.numpy as jnp
from jax.experimental import pallas as pl
from jax.experimental.pallas import tpu as pltpu

LANE = 128         # TPU lane width: feature dims padded to multiples of this
SUBLANE = 8        # f32 sublane granularity for the batch tile
NEG_SLOPE = 0.001  # matches nn.LeakyReLU(negative_slope=0.001) in the module


def _round_up(n, m):
    return ((n + m - 1) // m) * m


def _leaky_relu(x, slope=NEG_SLOPE):
    return jnp.where(x >= 0, x, slope * x)


def mlp_kernel(x_ref,
               w1_ref, b1_ref,
               w2_ref, b2_ref,
               w3_ref, b3_ref,
               w4_ref, b4_ref,
               w5_ref, b5_ref,
               o_ref):
    """One batch tile: 5 lane-dense MXU matmuls + f32 VPU bias/LeakyReLU epilogues."""

    def layer(h, w_ref, b_ref):
        # MXU matmul with f32 accumulation; cast LHS to the weight dtype so the
        # optional bf16 path feeds the MXU bf16 while the epilogue stays f32.
        y = jnp.dot(h.astype(w_ref.dtype), w_ref[...],
                    preferred_element_type=jnp.float32)
        b = b_ref[...]                      # (1, N) read once; broadcast in the add
        return _leaky_relu(y + b)           # f32 on the VPU

    h = x_ref[...]
    h = layer(h, w1_ref, b1_ref)
    h = layer(h, w2_ref, b2_ref)
    h = layer(h, w3_ref, b3_ref)
    h = layer(h, w4_ref, b4_ref)
    h = layer(h, w5_ref, b5_ref)
    o_ref[...] = h.astype(o_ref.dtype)      # full 128-lane-multiple store, unmasked


def classification_forward(x, params, *, block_batch=256, matmul_dtype=jnp.float32):
    """x: (B, inputs_count) f32; params: list of (W, b) with W (in, out), b (1, out)."""
    batch, inputs_count = x.shape
    nodes_count = params[0][0].shape[1]
    classes = params[-1][0].shape[1]

    # Lane-pad every feature dim to a multiple of 128.
    in_p = _round_up(inputs_count, LANE)
    hid_p = _round_up(nodes_count, LANE)
    cls_p = _round_up(classes, LANE)

    # Batch tile: up to `block_batch` rows, padded to a sublane multiple; pad the
    # batch itself so it divides evenly into tiles (extra rows are zeros and are
    # sliced off below — no masked partial tiles).
    tb = min(block_batch, _round_up(batch, SUBLANE))
    batch_p = _round_up(batch, tb)
    grid = (batch_p // tb,)

    # Zero-pad activations, weights, biases.
    xp = jnp.zeros((batch_p, in_p), matmul_dtype)
    xp = xp.at[:batch, :inputs_count].set(x.astype(matmul_dtype))

    real_dims = [(inputs_count, nodes_count)] + [(nodes_count, nodes_count)] * 3 \
                + [(nodes_count, classes)]
    pad_dims = [(in_p, hid_p)] + [(hid_p, hid_p)] * 3 + [(hid_p, cls_p)]

    flat_args = [xp]
    in_specs = [pl.BlockSpec((tb, in_p), lambda i: (i, 0))]
    for (w, b), (fi, fo), (fip, fop) in zip(params, real_dims, pad_dims):
        wp = jnp.zeros((fip, fop), matmul_dtype).at[:fi, :fo].set(w.astype(matmul_dtype))
        bp = jnp.zeros((1, fop), jnp.float32).at[:, :fo].set(
            b.reshape(1, -1).astype(jnp.float32))
        flat_args += [wp, bp]
        # Constant index maps -> weights/biases DMA'd once, resident across tiles.
        in_specs += [pl.BlockSpec((fip, fop), lambda i: (0, 0)),
                     pl.BlockSpec((1, fop), lambda i: (0, 0))]

    out_spec = pl.BlockSpec((tb, cls_p), lambda i: (i, 0))

    matmul_flops = 2 * batch_p * (in_p * hid_p + 3 * hid_p * hid_p + hid_p * cls_p)
    epilogue_flops = 3 * batch_p * (4 * hid_p + cls_p)       # bias add + leaky relu
    bytes_accessed = 4 * (batch_p * in_p + batch_p * cls_p
                          + in_p * hid_p + 3 * hid_p * hid_p + hid_p * cls_p
                          + 4 * hid_p + cls_p)

    out_padded = pl.pallas_call(
        mlp_kernel,
        out_shape=jax.ShapeDtypeStruct((batch_p, cls_p), jnp.float32),
        grid=grid,
        in_specs=in_specs,
        out_specs=out_spec,
        compiler_params=pltpu.CompilerParams(
            dimension_semantics=("parallel",)),          # shards tiles over v7x's 2 TCs
        cost_estimate=pl.CostEstimate(
            flops=matmul_flops + epilogue_flops,
            transcendentals=0,
            bytes_accessed=bytes_accessed),
    )(*flat_args)

    return out_padded[:batch, :classes]


def init_params(key, inputs_count, nodes_count, classes):
    """Deterministic init mimicking torch.nn.Linear default (U(-1/sqrt(fan_in), +))."""
    dims = [(inputs_count, nodes_count),
            (nodes_count, nodes_count),
            (nodes_count, nodes_count),
            (nodes_count, nodes_count),
            (nodes_count, classes)]
    params = []
    for (fan_in, fan_out) in dims:
        key, kw, kb = jax.random.split(key, 3)
        bound = 1.0 / jnp.sqrt(jnp.float32(fan_in))
        w = jax.random.uniform(kw, (fan_in, fan_out), jnp.float32, -bound, bound)
        b = jax.random.uniform(kb, (1, fan_out), jnp.float32, -bound, bound)
        params.append((w, b))
    return params


def reference_forward(x, params):
    """Plain-JAX reference for sanity checking the kernel."""
    h = x
    for w, b in params:
        h = _leaky_relu(h @ w + b)
    return h


if __name__ == "__main__":
    inputs_count, nodes_count, classes = 16, 32, 8
    batch = 8

    key = jax.random.PRNGKey(0)
    key, kx = jax.random.split(key)
    x = jax.random.normal(kx, (batch, inputs_count), jnp.float32)
    params = init_params(key, inputs_count, nodes_count, classes)

    out = classification_forward(x, params)
    out = jax.block_until_ready(out)

    ref = reference_forward(x, params)
    assert out.shape == (batch, classes), out.shape
    assert jnp.allclose(out, ref, atol=1e-5, rtol=1e-5), "mismatch vs reference"

    print("KERNEL_OK")
</pallas_src>

<mosaic_0001>
module attributes {stable_mosaic.version = 11 : i64} {
  func.func @mlp_kernel(%arg0: i32, %arg1: memref<8x128xf32, #tpu.memory_space<vmem>>, %arg2: memref<128x128xf32, #tpu.memory_space<vmem>>, %arg3: memref<1x128xf32, #tpu.memory_space<vmem>>, %arg4: memref<128x128xf32, #tpu.memory_space<vmem>>, %arg5: memref<1x128xf32, #tpu.memory_space<vmem>>, %arg6: memref<128x128xf32, #tpu.memory_space<vmem>>, %arg7: memref<1x128xf32, #tpu.memory_space<vmem>>, %arg8: memref<128x128xf32, #tpu.memory_space<vmem>>, %arg9: memref<1x128xf32, #tpu.memory_space<vmem>>, %arg10: memref<128x128xf32, #tpu.memory_space<vmem>>, %arg11: memref<1x128xf32, #tpu.memory_space<vmem>>, %arg12: memref<8x128xf32, #tpu.memory_space<vmem>>) attributes {dimension_semantics = [#tpu.dimension_semantics<parallel>], iteration_bounds = array<i64: 1>, scalar_prefetch = 0 : i64, scratch_operands = 0 : i64, tpu.core_type = #tpu.core_type<tc>, window_params = [{transform_indices = @transform_0, window_bounds = array<i64: 8, 128>}, {pipeline_mode = #tpu.pipeline_mode<synchronous>, transform_indices = @transform_1, window_bounds = array<i64: 128, 128>}, {pipeline_mode = #tpu.pipeline_mode<synchronous>, transform_indices = @transform_2, window_bounds = array<i64: 1, 128>}, {pipeline_mode = #tpu.pipeline_mode<synchronous>, transform_indices = @transform_3, window_bounds = array<i64: 128, 128>}, {pipeline_mode = #tpu.pipeline_mode<synchronous>, transform_indices = @transform_4, window_bounds = array<i64: 1, 128>}, {pipeline_mode = #tpu.pipeline_mode<synchronous>, transform_indices = @transform_5, window_bounds = array<i64: 128, 128>}, {pipeline_mode = #tpu.pipeline_mode<synchronous>, transform_indices = @transform_6, window_bounds = array<i64: 1, 128>}, {pipeline_mode = #tpu.pipeline_mode<synchronous>, transform_indices = @transform_7, window_bounds = array<i64: 128, 128>}, {pipeline_mode = #tpu.pipeline_mode<synchronous>, transform_indices = @transform_8, window_bounds = array<i64: 1, 128>}, {pipeline_mode = #tpu.pipeline_mode<synchronous>, transform_indices = @transform_9, window_bounds = array<i64: 128, 128>}, {pipeline_mode = #tpu.pipeline_mode<synchronous>, transform_indices = @transform_10, window_bounds = array<i64: 1, 128>}, {transform_indices = @transform_11, window_bounds = array<i64: 8, 128>}]} {
    %c0 = arith.constant 0 : index
    %c0_0 = arith.constant 0 : index
    %0 = vector.load %arg1[%c0, %c0_0] : memref<8x128xf32, #tpu.memory_space<vmem>>, vector<8x128xf32>
    %c0_1 = arith.constant 0 : index
    %c0_2 = arith.constant 0 : index
    %1 = vector.load %arg2[%c0_1, %c0_2] : memref<128x128xf32, #tpu.memory_space<vmem>>, vector<128x128xf32>
    %cst = arith.constant dense<0.000000e+00> : vector<8x128xf32>
    %2 = tpu.matmul %0, %1, %cst {dimension_numbers = #tpu.dot_dimension_numbers<[1], [0], [0], [1], [0, 0, 1, 1], [], []>} : vector<8x128xf32>, vector<128x128xf32>, vector<8x128xf32> -> vector<8x128xf32>
    %c0_3 = arith.constant 0 : index
    %c0_4 = arith.constant 0 : index
    %3 = vector.load %arg3[%c0_3, %c0_4] : memref<1x128xf32, #tpu.memory_space<vmem>>, vector<1x128xf32>
    %4 = vector.broadcast %3 : vector<1x128xf32> to vector<8x128xf32>
    %5 = arith.addf %2, %4 : vector<8x128xf32>
    %cst_5 = arith.constant 0.000000e+00 : f32
    %6 = vector.broadcast %cst_5 : f32 to vector<8x128xf32>
    %7 = arith.cmpf oge, %5, %6 : vector<8x128xf32>
    %cst_6 = arith.constant 1.000000e-03 : f32
    %8 = vector.broadcast %cst_6 : f32 to vector<8x128xf32>
    %9 = arith.mulf %8, %5 : vector<8x128xf32>
    %10 = arith.select %7, %5, %9 : vector<8x128xi1>, vector<8x128xf32>
    %c0_7 = arith.constant 0 : index
    %c0_8 = arith.constant 0 : index
    %11 = vector.load %arg4[%c0_7, %c0_8] : memref<128x128xf32, #tpu.memory_space<vmem>>, vector<128x128xf32>
    %cst_9 = arith.constant dense<0.000000e+00> : vector<8x128xf32>
    %12 = tpu.matmul %10, %11, %cst_9 {dimension_numbers = #tpu.dot_dimension_numbers<[1], [0], [0], [1], [0, 0, 1, 1], [], []>} : vector<8x128xf32>, vector<128x128xf32>, vector<8x128xf32> -> vector<8x128xf32>
    %c0_10 = arith.constant 0 : index
    %c0_11 = arith.constant 0 : index
    %13 = vector.load %arg5[%c0_10, %c0_11] : memref<1x128xf32, #tpu.memory_space<vmem>>, vector<1x128xf32>
    %14 = vector.broadcast %13 : vector<1x128xf32> to vector<8x128xf32>
    %15 = arith.addf %12, %14 : vector<8x128xf32>
    %cst_12 = arith.constant 0.000000e+00 : f32
    %16 = vector.broadcast %cst_12 : f32 to vector<8x128xf32>
    %17 = arith.cmpf oge, %15, %16 : vector<8x128xf32>
    %cst_13 = arith.constant 1.000000e-03 : f32
    %18 = vector.broadcast %cst_13 : f32 to vector<8x128xf32>
    %19 = arith.mulf %18, %15 : vector<8x128xf32>
    %20 = arith.select %17, %15, %19 : vector<8x128xi1>, vector<8x128xf32>
    %c0_14 = arith.constant 0 : index
    %c0_15 = arith.constant 0 : index
    %21 = vector.load %arg6[%c0_14, %c0_15] : memref<128x128xf32, #tpu.memory_space<vmem>>, vector<128x128xf32>
    %cst_16 = arith.constant dense<0.000000e+00> : vector<8x128xf32>
    %22 = tpu.matmul %20, %21, %cst_16 {dimension_numbers = #tpu.dot_dimension_numbers<[1], [0], [0], [1], [0, 0, 1, 1], [], []>} : vector<8x128xf32>, vector<128x128xf32>, vector<8x128xf32> -> vector<8x128xf32>
    %c0_17 = arith.constant 0 : index
    %c0_18 = arith.constant 0 : index
    %23 = vector.load %arg7[%c0_17, %c0_18] : memref<1x128xf32, #tpu.memory_space<vmem>>, vector<1x128xf32>
    %24 = vector.broadcast %23 : vector<1x128xf32> to vector<8x128xf32>
    %25 = arith.addf %22, %24 : vector<8x128xf32>
    %cst_19 = arith.constant 0.000000e+00 : f32
    %26 = vector.broadcast %cst_19 : f32 to vector<8x128xf32>
    %27 = arith.cmpf oge, %25, %26 : vector<8x128xf32>
    %cst_20 = arith.constant 1.000000e-03 : f32
    %28 = vector.broadcast %cst_20 : f32 to vector<8x128xf32>
    %29 = arith.mulf %28, %25 : vector<8x128xf32>
    %30 = arith.select %27, %25, %29 : vector<8x128xi1>, vector<8x128xf32>
    %c0_21 = arith.constant 0 : index
    %c0_22 = arith.constant 0 : index
    %31 = vector.load %arg8[%c0_21, %c0_22] : memref<128x128xf32, #tpu.memory_space<vmem>>, vector<128x128xf32>
    %cst_23 = arith.constant dense<0.000000e+00> : vector<8x128xf32>
    %32 = tpu.matmul %30, %31, %cst_23 {dimension_numbers = #tpu.dot_dimension_numbers<[1], [0], [0], [1], [0, 0, 1, 1], [], []>} : vector<8x128xf32>, vector<128x128xf32>, vector<8x128xf32> -> vector<8x128xf32>
    %c0_24 = arith.constant 0 : index
    %c0_25 = arith.constant 0 : index
    %33 = vector.load %arg9[%c0_24, %c0_25] : memref<1x128xf32, #tpu.memory_space<vmem>>, vector<1x128xf32>
    %34 = vector.broadcast %33 : vector<1x128xf32> to vector<8x128xf32>
    %35 = arith.addf %32, %34 : vector<8x128xf32>
    %cst_26 = arith.constant 0.000000e+00 : f32
    %36 = vector.broadcast %cst_26 : f32 to vector<8x128xf32>
    %37 = arith.cmpf oge, %35, %36 : vector<8x128xf32>
    %cst_27 = arith.constant 1.000000e-03 : f32
    %38 = vector.broadcast %cst_27 : f32 to vector<8x128xf32>
    %39 = arith.mulf %38, %35 : vector<8x128xf32>
    %40 = arith.select %37, %35, %39 : vector<8x128xi1>, vector<8x128xf32>
    %c0_28 = arith.constant 0 : index
    %c0_29 = arith.constant 0 : index
    %41 = vector.load %arg10[%c0_28, %c0_29] : memref<128x128xf32, #tpu.memory_space<vmem>>, vector<128x128xf32>
    %cst_30 = arith.constant dense<0.000000e+00> : vector<8x128xf32>
    %42 = tpu.matmul %40, %41, %cst_30 {dimension_numbers = #tpu.dot_dimension_numbers<[1], [0], [0], [1], [0, 0, 1, 1], [], []>} : vector<8x128xf32>, vector<128x128xf32>, vector<8x128xf32> -> vector<8x128xf32>
    %c0_31 = arith.constant 0 : index
    %c0_32 = arith.constant 0 : index
    %43 = vector.load %arg11[%c0_31, %c0_32] : memref<1x128xf32, #tpu.memory_space<vmem>>, vector<1x128xf32>
    %44 = vector.broadcast %43 : vector<1x128xf32> to vector<8x128xf32>
    %45 = arith.addf %42, %44 : vector<8x128xf32>
    %cst_33 = arith.constant 0.000000e+00 : f32
    %46 = vector.broadcast %cst_33 : f32 to vector<8x128xf32>
    %47 = arith.cmpf oge, %45, %46 : vector<8x128xf32>
    %cst_34 = arith.constant 1.000000e-03 : f32
    %48 = vector.broadcast %cst_34 : f32 to vector<8x128xf32>
    %49 = arith.mulf %48, %45 : vector<8x128xf32>
    %50 = arith.select %47, %45, %49 : vector<8x128xi1>, vector<8x128xf32>
    %c0_35 = arith.constant 0 : index
    %c0_36 = arith.constant 0 : index
    %51 = vector.load %arg12[%c0_35, %c0_36] : memref<8x128xf32, #tpu.memory_space<vmem>>, vector<8x128xf32>
    tpu.vector_store %arg12[%c0_35, %c0_36], %50 {strides = array<i32>} : memref<8x128xf32, #tpu.memory_space<vmem>>, vector<8x128xf32>,
    return
  }
  func.func @transform_0(%arg0: i32) -> (i32, i32) {
    %c0_i32 = arith.constant 0 : i32
    %c0_i32_0 = arith.constant 0 : i32
    return %arg0, %c0_i32 : i32, i32
  }
  func.func @transform_1(%arg0: i32) -> (i32, i32) {
    %c0_i32 = arith.constant 0 : i32
    %c0_i32_0 = arith.constant 0 : i32
    %c0_i32_1 = arith.constant 0 : i32
    return %c0_i32, %c0_i32_0 : i32, i32
  }
  func.func @transform_2(%arg0: i32) -> (i32, i32) {
    %c0_i32 = arith.constant 0 : i32
    %c0_i32_0 = arith.constant 0 : i32
    %c0_i32_1 = arith.constant 0 : i32
    return %c0_i32, %c0_i32_0 : i32, i32
  }
  func.func @transform_3(%arg0: i32) -> (i32, i32) {
    %c0_i32 = arith.constant 0 : i32
    %c0_i32_0 = arith.constant 0 : i32
    %c0_i32_1 = arith.constant 0 : i32
    return %c0_i32, %c0_i32_0 : i32, i32
  }
  func.func @transform_4(%arg0: i32) -> (i32, i32) {
    %c0_i32 = arith.constant 0 : i32
    %c0_i32_0 = arith.constant 0 : i32
    %c0_i32_1 = arith.constant 0 : i32
    return %c0_i32, %c0_i32_0 : i32, i32
  }
  func.func @transform_5(%arg0: i32) -> (i32, i32) {
    %c0_i32 = arith.constant 0 : i32
    %c0_i32_0 = arith.constant 0 : i32
    %c0_i32_1 = arith.constant 0 : i32
    return %c0_i32, %c0_i32_0 : i32, i32
  }
  func.func @transform_6(%arg0: i32) -> (i32, i32) {
    %c0_i32 = arith.constant 0 : i32
    %c0_i32_0 = arith.constant 0 : i32
    %c0_i32_1 = arith.constant 0 : i32
    return %c0_i32, %c0_i32_0 : i32, i32
  }
  func.func @transform_7(%arg0: i32) -> (i32, i32) {
    %c0_i32 = arith.constant 0 : i32
    %c0_i32_0 = arith.constant 0 : i32
    %c0_i32_1 = arith.constant 0 : i32
    return %c0_i32, %c0_i32_0 : i32, i32
  }
  func.func @transform_8(%arg0: i32) -> (i32, i32) {
    %c0_i32 = arith.constant 0 : i32
    %c0_i32_0 = arith.constant 0 : i32
    %c0_i32_1 = arith.constant 0 : i32
    return %c0_i32, %c0_i32_0 : i32, i32
  }
  func.func @transform_9(%arg0: i32) -> (i32, i32) {
    %c0_i32 = arith.constant 0 : i32
    %c0_i32_0 = arith.constant 0 : i32
    %c0_i32_1 = arith.constant 0 : i32
    return %c0_i32, %c0_i32_0 : i32, i32
  }
  func.func @transform_10(%arg0: i32) -> (i32, i32) {
    %c0_i32 = arith.constant 0 : i32
    %c0_i32_0 = arith.constant 0 : i32
    %c0_i32_1 = arith.constant 0 : i32
    return %c0_i32, %c0_i32_0 : i32, i32
  }
  func.func @transform_11(%arg0: i32) -> (i32, i32) {
    %c0_i32 = arith.constant 0 : i32
    %c0_i32_0 = arith.constant 0 : i32
    return %arg0, %c0_i32 : i32, i32
  }
}

</mosaic_0001>

<llo_original>
// kernel: tpu_custom_call.1
$region0: #{tpu_custom_call.1}
  #allocation0 [shape = 'u32[]', space=smem, size = 0x4, offset = 0x4, fixed_abs, tag = 'smem constant byte address 0x4 - core index']
  #allocation1 [shape = 'u32[144,128]{1,0:T(1,128)}', space=vmem, size = 0x12000, scoped, tag = 'internal scratch']
  %s0 = inlined_call_operand.hbm [shape: f32[8,128], index: 0, kind: input, shape index: {}]
  %s1 = inlined_call_operand.hbm [shape: f32[128,128], index: 1, kind: input, shape index: {}]
  %s2 = inlined_call_operand.vmem [shape: f32[1,128], index: 2, kind: input, shape index: {}]
  %s3 = inlined_call_operand.hbm [shape: f32[128,128], index: 3, kind: input, shape index: {}]
  %s4 = inlined_call_operand.vmem [shape: f32[1,128], index: 4, kind: input, shape index: {}]
  %s5 = inlined_call_operand.hbm [shape: f32[128,128], index: 5, kind: input, shape index: {}]
  %s6 = inlined_call_operand.vmem [shape: f32[1,128], index: 6, kind: input, shape index: {}]
  %s7 = inlined_call_operand.hbm [shape: f32[128,128], index: 7, kind: input, shape index: {}]
  %s8 = inlined_call_operand.vmem [shape: f32[1,128], index: 8, kind: input, shape index: {}]
  %s9 = inlined_call_operand.hbm [shape: f32[128,128], index: 9, kind: input, shape index: {}]
  %s10 = inlined_call_operand.vmem [shape: f32[1,128], index: 10, kind: input, shape index: {}]
  %s11 = inlined_call_operand.hbm [shape: f32[8,128], index: 11, kind: output, shape index: {}]
  %s12 = sld [smem:[#allocation0]]
  $region78: #{tpu_custom_call.1} parent=0
    _
  %s14 = ssub.s32 1, %s12
  %s15 = scalar_select 0, %s14, %s12
  $region1: #{tpu_custom_call.1} parent=0
    #allocation2 [shape = 'u8[4096]{0}', space=vmem, size = 0x1000, scoped, tag = 'input window, operand 0, single buffered']
    #allocation3 [shape = 's32[1]{0}', space=sflag, size = 0x4, scoped, tag = 'scoped memory for tpu_custom_call.1']
    #allocation4 [shape = 's32[1]{0}', space=sflag, size = 0x4, scoped, tag = 'scoped memory for tpu_custom_call.1']
    #allocation5 [shape = 'u8[65536]{0}', space=vmem, size = 0x10000, scoped, tag = 'input window, operand 1, single buffered']
    #allocation6 [shape = 's32[1]{0}', space=sflag, size = 0x4, scoped, tag = 'scoped memory for tpu_custom_call.1']
    #allocation7 [shape = 'u8[65536]{0}', space=vmem, size = 0x10000, scoped, tag = 'input window, operand 3, single buffered']
    #allocation8 [shape = 'u8[65536]{0}', space=vmem, size = 0x10000, scoped, tag = 'input window, operand 5, single buffered']
    #allocation9 [shape = 's32[1]{0}', space=sflag, size = 0x4, scoped, tag = 'scoped memory for tpu_custom_call.1']
    #allocation10 [shape = 'u8[65536]{0}', space=vmem, size = 0x10000, scoped, tag = 'input window, operand 7, single buffered']
    #allocation11 [shape = 'u8[65536]{0}', space=vmem, size = 0x10000, scoped, tag = 'input window, operand 9, single buffered']
    #allocation12 [shape = 's32[1]{0}', space=sflag, size = 0x4, scoped, tag = 'scoped memory for tpu_custom_call.1']
    #allocation13 [shape = 'u8[4096]{0}', space=vmem, size = 0x1000, scoped, tag = 'output window, operand 0, single buffered']
    %16 = vsyncpa [#allocation3], 0
    %17 = vsyncpa [#allocation6], 0
    %18 = vsyncpa [#allocation9], 0
    %19 = vsyncpa [#allocation12], 0
    %20 = vsyncpa [#allocation4], 0
    // Predicated region
    $region2: #{tpu_custom_call.1} parent=1 // pred_check
      _
    $region3: #{tpu_custom_call.1} parent=1 // pred_check_branch
      %22 = sbr.rel (0) target = $region5
    $region4: #{tpu_custom_call.1} parent=1 // pred_region
      %s24 = ssub.s32 128, 128
      %25 = vsyncadd [#allocation3], %s24
      %s27 = sshll.u32 [#allocation2], 4
      %s28 = int_to_ptr.vmem [resolvable:$true] %s27
      %30 = dma.hbm_to_vmem [thread:$0]  %s0, 128, %s28, [#allocation3]
    $region5: #{tpu_custom_call.1} parent=1 // pred_fallthru
      _
    // Predicated region
    $region6: #{tpu_custom_call.1} parent=1 // pred_check
      _
    $region7: #{tpu_custom_call.1} parent=1 // pred_check_branch
      %32 = sbr.rel (0) target = $region9
    $region8: #{tpu_custom_call.1} parent=1 // pred_region
      %s34 = ssub.s32 2048, 2048
      %35 = vsyncadd [#allocation6], %s34
      %s36 = sshll.u32 [#allocation5], 4
      %s37 = int_to_ptr.vmem [resolvable:$true] %s36
      %42 = dma.hbm_to_vmem [thread:$0]  %s1, 2048, %s37, [#allocation6], 128, 128, 8
    $region9: #{tpu_custom_call.1} parent=1 // pred_fallthru
      _
    // Predicated region
    $region10: #{tpu_custom_call.1} parent=1 // pred_check
      _
    $region11: #{tpu_custom_call.1} parent=1 // pred_check_branch
      %44 = sbr.rel (0) target = $region13
    $region12: #{tpu_custom_call.1} parent=1 // pred_region
      _
    $region13: #{tpu_custom_call.1} parent=1 // pred_fallthru
      _
    // Predicated region
    $region14: #{tpu_custom_call.1} parent=1 // pred_check
      _
    $region15: #{tpu_custom_call.1} parent=1 // pred_check_branch
      %46 = sbr.rel (0) target = $region17
    $region16: #{tpu_custom_call.1} parent=1 // pred_region
      %s48 = ssub.s32 2048, 2048
      %49 = vsyncadd [#allocation6], %s48
      %s50 = sshll.u32 [#allocation7], 4
      %s51 = int_to_ptr.vmem [resolvable:$true] %s50
      %56 = dma.hbm_to_vmem [thread:$0]  %s3, 2048, %s51, [#allocation6], 128, 128, 8
    $region17: #{tpu_custom_call.1} parent=1 // pred_fallthru
      _
    // Predicated region
    $region18: #{tpu_custom_call.1} parent=1 // pred_check
      _
    $region19: #{tpu_custom_call.1} parent=1 // pred_check_branch
      %58 = sbr.rel (0) target = $region21
    $region20: #{tpu_custom_call.1} parent=1 // pred_region
      _
    $region21: #{tpu_custom_call.1} parent=1 // pred_fallthru
      _
    // Predicated region
    $region22: #{tpu_custom_call.1} parent=1 // pred_check
      _
    $region23: #{tpu_custom_call.1} parent=1 // pred_check_branch
      %60 = sbr.rel (0) target = $region25
    $region24: #{tpu_custom_call.1} parent=1 // pred_region
      %s62 = ssub.s32 2048, 2048
      %63 = vsyncadd [#allocation9], %s62
      %s64 = sshll.u32 [#allocation8], 4
      %s65 = int_to_ptr.vmem [resolvable:$true] %s64
      %70 = dma.hbm_to_vmem [thread:$0]  %s5, 2048, %s65, [#allocation9], 128, 128, 8
    $region25: #{tpu_custom_call.1} parent=1 // pred_fallthru
      _
    // Predicated region
    $region26: #{tpu_custom_call.1} parent=1 // pred_check
      _
    $region27: #{tpu_custom_call.1} parent=1 // pred_check_branch
      %72 = sbr.rel (0) target = $region29
    $region28: #{tpu_custom_call.1} parent=1 // pred_region
      _
    $region29: #{tpu_custom_call.1} parent=1 // pred_fallthru
      _
    // Predicated region
    $region30: #{tpu_custom_call.1} parent=1 // pred_check
      _
    $region31: #{tpu_custom_call.1} parent=1 // pred_check_branch
      %74 = sbr.rel (0) target = $region33
    $region32: #{tpu_custom_call.1} parent=1 // pred_region
      %s76 = ssub.s32 2048, 2048
      %77 = vsyncadd [#allocation9], %s76
      %s78 = sshll.u32 [#allocation10], 4
      %s79 = int_to_ptr.vmem [resolvable:$true] %s78
      %84 = dma.hbm_to_vmem [thread:$0]  %s7, 2048, %s79, [#allocation9], 128, 128, 8
    $region33: #{tpu_custom_call.1} parent=1 // pred_fallthru
      _
    // Predicated region
    $region34: #{tpu_custom_call.1} parent=1 // pred_check
      _
    $region35: #{tpu_custom_call.1} parent=1 // pred_check_branch
      %86 = sbr.rel (0) target = $region37
    $region36: #{tpu_custom_call.1} parent=1 // pred_region
      _
    $region37: #{tpu_custom_call.1} parent=1 // pred_fallthru
      _
    // Predicated region
    $region38: #{tpu_custom_call.1} parent=1 // pred_check
      _
    $region39: #{tpu_custom_call.1} parent=1 // pred_check_branch
      %88 = sbr.rel (0) target = $region41
    $region40: #{tpu_custom_call.1} parent=1 // pred_region
      %s90 = ssub.s32 2048, 2048
      %91 = vsyncadd [#allocation12], %s90
      %s92 = sshll.u32 [#allocation11], 4
      %s93 = int_to_ptr.vmem [resolvable:$true] %s92
      %98 = dma.hbm_to_vmem [thread:$0]  %s9, 2048, %s93, [#allocation12], 128, 128, 8
    $region41: #{tpu_custom_call.1} parent=1 // pred_fallthru
      _
    // Predicated region
    $region42: #{tpu_custom_call.1} parent=1 // pred_check
      _
    $region43: #{tpu_custom_call.1} parent=1 // pred_check_branch
      %100 = sbr.rel (0) target = $region45
    $region44: #{tpu_custom_call.1} parent=1 // pred_region
      _
    $region45: #{tpu_custom_call.1} parent=1 // pred_fallthru
      _
    // Predicated region
    $region46: #{tpu_custom_call.1} parent=1 // pred_check
      _
    $region47: #{tpu_custom_call.1} parent=1 // pred_check_branch
      %102 = sbr.rel (0) target = $region49
    $region48: #{tpu_custom_call.1} parent=1 // pred_region
      %103 = dma.done [#allocation3], 128
    $region49: #{tpu_custom_call.1} parent=1 // pred_fallthru
      _
    // Predicated region
    $region50: #{tpu_custom_call.1} parent=1 // pred_check
      _
    $region51: #{tpu_custom_call.1} parent=1 // pred_check_branch
      %105 = sbr.rel (0) target = $region53
    $region52: #{tpu_custom_call.1} parent=1 // pred_region
      %106 = dma.done [#allocation6], 2048
    $region53: #{tpu_custom_call.1} parent=1 // pred_fallthru
      _
    // Predicated region
    $region54: #{tpu_custom_call.1} parent=1 // pred_check
      _
    $region55: #{tpu_custom_call.1} parent=1 // pred_check_branch
      %108 = sbr.rel (0) target = $region57
    $region56: #{tpu_custom_call.1} parent=1 // pred_region
      %109 = dma.done [#allocation6], 2048
    $region57: #{tpu_custom_call.1} parent=1 // pred_fallthru
      _
    // Predicated region
    $region58: #{tpu_custom_call.1} parent=1 // pred_check
      _
    $region59: #{tpu_custom_call.1} parent=1 // pred_check_branch
      %111 = sbr.rel (0) target = $region61
    $region60: #{tpu_custom_call.1} parent=1 // pred_region
      %112 = dma.done [#allocation9], 2048
    $region61: #{tpu_custom_call.1} parent=1 // pred_fallthru
      _
    // Predicated region
    $region62: #{tpu_custom_call.1} parent=1 // pred_check
      _
    $region63: #{tpu_custom_call.1} parent=1 // pred_check_branch
      %114 = sbr.rel (0) target = $region65
    $region64: #{tpu_custom_call.1} parent=1 // pred_region
      %115 = dma.done [#allocation9], 2048
    $region65: #{tpu_custom_call.1} parent=1 // pred_fallthru
      _
    // Predicated region
    $region66: #{tpu_custom_call.1} parent=1 // pred_check
      _
    $region67: #{tpu_custom_call.1} parent=1 // pred_check_branch
      %117 = sbr.rel (0) target = $region69
    $region68: #{tpu_custom_call.1} parent=1 // pred_region
      %118 = dma.done [#allocation12], 2048
    $region69: #{tpu_custom_call.1} parent=1 // pred_fallthru
      _
    %v119 = vld [vmem:[#allocation2] sm:$0xff]
    %v120 = vld [vmem:[#allocation5] sm:$0xff]
    %v121 = vld [vmem:[#allocation5 + $0x8] sm:$0xff]
    %v122 = vld [vmem:[#allocation5 + $0x10] sm:$0xff]
    %v123 = vld [vmem:[#allocation5 + $0x18] sm:$0xff]
    %v124 = vld [vmem:[#allocation5 + $0x20] sm:$0xff]
    %v125 = vld [vmem:[#allocation5 + $0x28] sm:$0xff]
    %v126 = vld [vmem:[#allocation5 + $0x30] sm:$0xff]
    %v127 = vld [vmem:[#allocation5 + $0x38] sm:$0xff]
    %v128 = vld [vmem:[#allocation5 + $0x40] sm:$0xff]
    %v129 = vld [vmem:[#allocation5 + $0x48] sm:$0xff]
    %v130 = vld [vmem:[#allocation5 + $0x50] sm:$0xff]
    %v131 = vld [vmem:[#allocation5 + $0x58] sm:$0xff]
    %v132 = vld [vmem:[#allocation5 + $0x60] sm:$0xff]
    %v133 = vld [vmem:[#allocation5 + $0x68] sm:$0xff]
    %v134 = vld [vmem:[#allocation5 + $0x70] sm:$0xff]
    %v135 = vld [vmem:[#allocation5 + $0x78] sm:$0xff]
    %v136 = vld [vmem:[%s2] sm:$0x1]
    %v138 = vlaneseq
    %v139 = vshrl.u32 %v138, 7
    %v140 = vsub.s32 0, %v139
    %v141 = vrot.slane %v136, %v140
    %143 = vmatprep.subr.mxu0 0.0
    %144 = vmatpush1.msra.mxu0 %v120
    %145 = vmatprep.subr.mxu0 0.0
    %146 = vmatpush1.msra.mxu0 %v121
    %147 = vmatprep.subr.mxu0 0.0
    %148 = vmatpush1.msra.mxu0 %v122
    %149 = vmatprep.subr.mxu0 0.0
    %150 = vmatpush1.msra.mxu0 %v123
    %151 = vmatprep.subr.mxu0 0.0
    %152 = vmatpush1.msra.mxu0 %v124
    %153 = vmatprep.subr.mxu0 0.0
    %154 = vmatpush1.msra.mxu0 %v125
    %155 = vmatprep.subr.mxu0 0.0
    %156 = vmatpush1.msra.mxu0 %v126
    %157 = vmatprep.subr.mxu0 0.0
    %158 = vmatpush1.msra.mxu0 %v127
    %159 = vmatprep.subr.mxu0 0.0
    %160 = vmatpush1.msra.mxu0 %v128
    %161 = vmatprep.subr.mxu0 0.0
    %162 = vmatpush1.msra.mxu0 %v129
    %163 = vmatprep.subr.mxu0 0.0
    %164 = vmatpush1.msra.mxu0 %v130
    %165 = vmatprep.subr.mxu0 0.0
    %166 = vmatpush1.msra.mxu0 %v131
    %167 = vmatprep.subr.mxu0 0.0
    %168 = vmatpush1.msra.mxu0 %v132
    %169 = vmatprep.subr.mxu0 0.0
    %170 = vmatpush1.msra.mxu0 %v133
    %171 = vmatprep.subr.mxu0 0.0
    %172 = vmatpush1.msra.mxu0 %v134
    %173 = vmatprep.subr.mxu0 0.0
    %174 = vmatpush1.msra.mxu0 %v135
    %175 = vmatprep.subr.mxu0 0.0
    %176 = vmatpush1.msra.mxu0 0.0
    %177 = vmatprep.subr.mxu0 0.0
    %178 = vmatpush1.msra.mxu0 0.0
    %179 = vmatprep.subr.mxu0 0.0
    %180 = vmatpush1.msra.mxu0 0.0
    %181 = vmatprep.subr.mxu0 0.0
    %182 = vmatpush1.msra.mxu0 0.0
    %183 = vmatprep.subr.mxu0 0.0
    %184 = vmatpush1.msra.mxu0 0.0
    %185 = vmatprep.subr.mxu0 0.0
    %186 = vmatpush1.msra.mxu0 0.0
    %187 = vmatprep.subr.mxu0 0.0
    %188 = vmatpush1.msra.mxu0 0.0
    %189 = vmatprep.subr.mxu0 0.0
    %190 = vmatpush1.msra.mxu0 0.0
    %191 = vmatprep.subr.mxu0 0.0
    %192 = vmatpush1.msra.mxu0 0.0
    %193 = vmatprep.subr.mxu0 0.0
    %194 = vmatpush1.msra.mxu0 0.0
    %195 = vmatprep.subr.mxu0 0.0
    %196 = vmatpush1.msra.mxu0 0.0
    %197 = vmatprep.subr.mxu0 0.0
    %198 = vmatpush1.msra.mxu0 0.0
    %199 = vmatprep.subr.mxu0 0.0
    %200 = vmatpush1.msra.mxu0 0.0
    %201 = vmatprep.subr.mxu0 0.0
    %202 = vmatpush1.msra.mxu0 0.0
    %203 = vmatprep.subr.mxu0 0.0
    %204 = vmatpush1.msra.mxu0 0.0
    %205 = vmatprep.subr.mxu0 0.0
    %206 = vmatpush1.msra.mxu0 0.0
    %207 = vmatprep.mubr.f32.mxu0 0.0
    %208 = vmatmul.mubr.f32.gmra.mrb[0].mxu0 %v119
    %v209 = vpop.f32.mrb[0].mxu0
    %v210 = vadd.f32 %v141, %v209
    %v211 = vpop.f32.mrb[0].mxu0
    %212 = vdwg.mxu0
    %vm213 = vcmp.ge.f32.partialorder %v210, 0.0
    %v214 = vmul.f32 %v210, 0.001
    %v215 = vsel %vm213, %v210, %v214
    %v216 = vld [vmem:[#allocation7] sm:$0xff]
    %v217 = vld [vmem:[#allocation7 + $0x8] sm:$0xff]
    %v218 = vld [vmem:[#allocation7 + $0x10] sm:$0xff]
    %v219 = vld [vmem:[#allocation7 + $0x18] sm:$0xff]
    %v220 = vld [vmem:[#allocation7 + $0x20] sm:$0xff]
    %v221 = vld [vmem:[#allocation7 + $0x28] sm:$0xff]
    %v222 = vld [vmem:[#allocation7 + $0x30] sm:$0xff]
    %v223 = vld [vmem:[#allocation7 + $0x38] sm:$0xff]
    %v224 = vld [vmem:[#allocation7 + $0x40] sm:$0xff]
    %v225 = vld [vmem:[#allocation7 + $0x48] sm:$0xff]
    %v226 = vld [vmem:[#allocation7 + $0x50] sm:$0xff]
    %v227 = vld [vmem:[#allocation7 + $0x58] sm:$0xff]
    %v228 = vld [vmem:[#allocation7 + $0x60] sm:$0xff]
    %v229 = vld [vmem:[#allocation7 + $0x68] sm:$0xff]
    %v230 = vld [vmem:[#allocation7 + $0x70] sm:$0xff]
    %v231 = vld [vmem:[#allocation7 + $0x78] sm:$0xff]
    %v232 = vld [vmem:[%s4] sm:$0x1]
    %v234 = vlaneseq
    %v235 = vshrl.u32 %v234, 7
    %v236 = vsub.s32 0, %v235
    %v237 = vrot.slane %v232, %v236
    %239 = vmatprep.subr.mxu0 0.0
    %240 = vmatpush1.msra.mxu0 %v216
    %241 = vmatprep.subr.mxu0 0.0
    %242 = vmatpush1.msra.mxu0 %v217
    %243 = vmatprep.subr.mxu0 0.0
    %244 = vmatpush1.msra.mxu0 %v218
    %245 = vmatprep.subr.mxu0 0.0
    %246 = vmatpush1.msra.mxu0 %v219
    %247 = vmatprep.subr.mxu0 0.0
    %248 = vmatpush1.msra.mxu0 %v220
    %249 = vmatprep.subr.mxu0 0.0
    %250 = vmatpush1.msra.mxu0 %v221
    %251 = vmatprep.subr.mxu0 0.0
    %252 = vmatpush1.msra.mxu0 %v222
    %253 = vmatprep.subr.mxu0 0.0
    %254 = vmatpush1.msra.mxu0 %v223
    %255 = vmatprep.subr.mxu0 0.0
    %256 = vmatpush1.msra.mxu0 %v224
    %257 = vmatprep.subr.mxu0 0.0
    %258 = vmatpush1.msra.mxu0 %v225
    %259 = vmatprep.subr.mxu0 0.0
    %260 = vmatpush1.msra.mxu0 %v226
    %261 = vmatprep.subr.mxu0 0.0
    %262 = vmatpush1.msra.mxu0 %v227
    %263 = vmatprep.subr.mxu0 0.0
    %264 = vmatpush1.msra.mxu0 %v228
    %265 = vmatprep.subr.mxu0 0.0
    %266 = vmatpush1.msra.mxu0 %v229
    %267 = vmatprep.subr.mxu0 0.0
    %268 = vmatpush1.msra.mxu0 %v230
    %269 = vmatprep.subr.mxu0 0.0
    %270 = vmatpush1.msra.mxu0 %v231
    %271 = vmatprep.subr.mxu0 0.0
    %272 = vmatpush1.msra.mxu0 0.0
    %273 = vmatprep.subr.mxu0 0.0
    %274 = vmatpush1.msra.mxu0 0.0
    %275 = vmatprep.subr.mxu0 0.0
    %276 = vmatpush1.msra.mxu0 0.0
    %277 = vmatprep.subr.mxu0 0.0
    %278 = vmatpush1.msra.mxu0 0.0
    %279 = vmatprep.subr.mxu0 0.0
    %280 = vmatpush1.msra.mxu0 0.0
    %281 = vmatprep.subr.mxu0 0.0
    %282 = vmatpush1.msra.mxu0 0.0
    %283 = vmatprep.subr.mxu0 0.0
    %284 = vmatpush1.msra.mxu0 0.0
    %285 = vmatprep.subr.mxu0 0.0
    %286 = vmatpush1.msra.mxu0 0.0
    %287 = vmatprep.subr.mxu0 0.0
    %288 = vmatpush1.msra.mxu0 0.0
    %289 = vmatprep.subr.mxu0 0.0
    %290 = vmatpush1.msra.mxu0 0.0
    %291 = vmatprep.subr.mxu0 0.0
    %292 = vmatpush1.msra.mxu0 0.0
    %293 = vmatprep.subr.mxu0 0.0
    %294 = vmatpush1.msra.mxu0 0.0
    %295 = vmatprep.subr.mxu0 0.0
    %296 = vmatpush1.msra.mxu0 0.0
    %297 = vmatprep.subr.mxu0 0.0
    %298 = vmatpush1.msra.mxu0 0.0
    %299 = vmatprep.subr.mxu0 0.0
    %300 = vmatpush1.msra.mxu0 0.0
    %301 = vmatprep.subr.mxu0 0.0
    %302 = vmatpush1.msra.mxu0 0.0
    %303 = vmatprep.mubr.f32.mxu0 0.0
    %304 = vmatmul.mubr.f32.gmra.mrb[0].mxu0 %v215
    %v305 = vpop.f32.mrb[0].mxu0
    %v306 = vadd.f32 %v237, %v305
    %v307 = vpop.f32.mrb[0].mxu0
    %308 = vdwg.mxu0
    %vm309 = vcmp.ge.f32.partialorder %v306, 0.0
    %v310 = vmul.f32 %v306, 0.001
    %v311 = vsel %vm309, %v306, %v310
    %v312 = vld [vmem:[#allocation8] sm:$0xff]
    %v313 = vld [vmem:[#allocation8 + $0x8] sm:$0xff]
    %v314 = vld [vmem:[#allocation8 + $0x10] sm:$0xff]
    %v315 = vld [vmem:[#allocation8 + $0x18] sm:$0xff]
    %v316 = vld [vmem:[#allocation8 + $0x20] sm:$0xff]
    %v317 = vld [vmem:[#allocation8 + $0x28] sm:$0xff]
    %v318 = vld [vmem:[#allocation8 + $0x30] sm:$0xff]
    %v319 = vld [vmem:[#allocation8 + $0x38] sm:$0xff]
    %v320 = vld [vmem:[#allocation8 + $0x40] sm:$0xff]
    %v321 = vld [vmem:[#allocation8 + $0x48] sm:$0xff]
    %v322 = vld [vmem:[#allocation8 + $0x50] sm:$0xff]
    %v323 = vld [vmem:[#allocation8 + $0x58] sm:$0xff]
    %v324 = vld [vmem:[#allocation8 + $0x60] sm:$0xff]
    %v325 = vld [vmem:[#allocation8 + $0x68] sm:$0xff]
    %v326 = vld [vmem:[#allocation8 + $0x70] sm:$0xff]
    %v327 = vld [vmem:[#allocation8 + $0x78] sm:$0xff]
    %v328 = vld [vmem:[%s6] sm:$0x1]
    %v330 = vlaneseq
    %v331 = vshrl.u32 %v330, 7
    %v332 = vsub.s32 0, %v331
    %v333 = vrot.slane %v328, %v332
    %335 = vmatprep.subr.mxu0 0.0
    %336 = vmatpush1.msra.mxu0 %v312
    %337 = vmatprep.subr.mxu0 0.0
    %338 = vmatpush1.msra.mxu0 %v313
    %339 = vmatprep.subr.mxu0 0.0
    %340 = vmatpush1.msra.mxu0 %v314
    %341 = vmatprep.subr.mxu0 0.0
    %342 = vmatpush1.msra.mxu0 %v315
    %343 = vmatprep.subr.mxu0 0.0
    %344 = vmatpush1.msra.mxu0 %v316
    %345 = vmatprep.subr.mxu0 0.0
    %346 = vmatpush1.msra.mxu0 %v317
    %347 = vmatprep.subr.mxu0 0.0
    %348 = vmatpush1.msra.mxu0 %v318
    %349 = vmatprep.subr.mxu0 0.0
    %350 = vmatpush1.msra.mxu0 %v319
    %351 = vmatprep.subr.mxu0 0.0
    %352 = vmatpush1.msra.mxu0 %v320
    %353 = vmatprep.subr.mxu0 0.0
    %354 = vmatpush1.msra.mxu0 %v321
    %355 = vmatprep.subr.mxu0 0.0
    %356 = vmatpush1.msra.mxu0 %v322
    %357 = vmatprep.subr.mxu0 0.0
    %358 = vmatpush1.msra.mxu0 %v323
    %359 = vmatprep.subr.mxu0 0.0
    %360 = vmatpush1.msra.mxu0 %v324
    %361 = vmatprep.subr.mxu0 0.0
    %362 = vmatpush1.msra.mxu0 %v325
    %363 = vmatprep.subr.mxu0 0.0
    %364 = vmatpush1.msra.mxu0 %v326
    %365 = vmatprep.subr.mxu0 0.0
    %366 = vmatpush1.msra.mxu0 %v327
    %367 = vmatprep.subr.mxu0 0.0
    %368 = vmatpush1.msra.mxu0 0.0
    %369 = vmatprep.subr.mxu0 0.0
    %370 = vmatpush1.msra.mxu0 0.0
    %371 = vmatprep.subr.mxu0 0.0
    %372 = vmatpush1.msra.mxu0 0.0
    %373 = vmatprep.subr.mxu0 0.0
    %374 = vmatpush1.msra.mxu0 0.0
    %375 = vmatprep.subr.mxu0 0.0
    %376 = vmatpush1.msra.mxu0 0.0
    %377 = vmatprep.subr.mxu0 0.0
    %378 = vmatpush1.msra.mxu0 0.0
    %379 = vmatprep.subr.mxu0 0.0
    %380 = vmatpush1.msra.mxu0 0.0
    %381 = vmatprep.subr.mxu0 0.0
    %382 = vmatpush1.msra.mxu0 0.0
    %383 = vmatprep.subr.mxu0 0.0
    %384 = vmatpush1.msra.mxu0 0.0
    %385 = vmatprep.subr.mxu0 0.0
    %386 = vmatpush1.msra.mxu0 0.0
    %387 = vmatprep.subr.mxu0 0.0
    %388 = vmatpush1.msra.mxu0 0.0
    %389 = vmatprep.subr.mxu0 0.0
    %390 = vmatpush1.msra.mxu0 0.0
    %391 = vmatprep.subr.mxu0 0.0
    %392 = vmatpush1.msra.mxu0 0.0
    %393 = vmatprep.subr.mxu0 0.0
    %394 = vmatpush1.msra.mxu0 0.0
    %395 = vmatprep.subr.mxu0 0.0
    %396 = vmatpush1.msra.mxu0 0.0
    %397 = vmatprep.subr.mxu0 0.0
    %398 = vmatpush1.msra.mxu0 0.0
    %399 = vmatprep.mubr.f32.mxu0 0.0
    %400 = vmatmul.mubr.f32.gmra.mrb[0].mxu0 %v311
    %v401 = vpop.f32.mrb[0].mxu0
    %v402 = vadd.f32 %v333, %v401
    %v403 = vpop.f32.mrb[0].mxu0
    %404 = vdwg.mxu0
    %vm405 = vcmp.ge.f32.partialorder %v402, 0.0
    %v406 = vmul.f32 %v402, 0.001
    %v407 = vsel %vm405, %v402, %v406
    %v408 = vld [vmem:[#allocation10] sm:$0xff]
    %v409 = vld [vmem:[#allocation10 + $0x8] sm:$0xff]
    %v410 = vld [vmem:[#allocation10 + $0x10] sm:$0xff]
    %v411 = vld [vmem:[#allocation10 + $0x18] sm:$0xff]
    %v412 = vld [vmem:[#allocation10 + $0x20] sm:$0xff]
    %v413 = vld [vmem:[#allocation10 + $0x28] sm:$0xff]
    %v414 = vld [vmem:[#allocation10 + $0x30] sm:$0xff]
    %v415 = vld [vmem:[#allocation10 + $0x38] sm:$0xff]
    %v416 = vld [vmem:[#allocation10 + $0x40] sm:$0xff]
    %v417 = vld [vmem:[#allocation10 + $0x48] sm:$0xff]
    %v418 = vld [vmem:[#allocation10 + $0x50] sm:$0xff]
    %v419 = vld [vmem:[#allocation10 + $0x58] sm:$0xff]
    %v420 = vld [vmem:[#allocation10 + $0x60] sm:$0xff]
    %v421 = vld [vmem:[#allocation10 + $0x68] sm:$0xff]
    %v422 = vld [vmem:[#allocation10 + $0x70] sm:$0xff]
    %v423 = vld [vmem:[#allocation10 + $0x78] sm:$0xff]
    %v424 = vld [vmem:[%s8] sm:$0x1]
    %v426 = vlaneseq
    %v427 = vshrl.u32 %v426, 7
    %v428 = vsub.s32 0, %v427
    %v429 = vrot.slane %v424, %v428
    %431 = vmatprep.subr.mxu0 0.0
    %432 = vmatpush1.msra.mxu0 %v408
    %433 = vmatprep.subr.mxu0 0.0
    %434 = vmatpush1.msra.mxu0 %v409
    %435 = vmatprep.subr.mxu0 0.0
    %436 = vmatpush1.msra.mxu0 %v410
    %437 = vmatprep.subr.mxu0 0.0
    %438 = vmatpush1.msra.mxu0 %v411
    %439 = vmatprep.subr.mxu0 0.0
    %440 = vmatpush1.msra.mxu0 %v412
    %441 = vmatprep.subr.mxu0 0.0
    %442 = vmatpush1.msra.mxu0 %v413
    %443 = vmatprep.subr.mxu0 0.0
    %444 = vmatpush1.msra.mxu0 %v414
    %445 = vmatprep.subr.mxu0 0.0
    %446 = vmatpush1.msra.mxu0 %v415
    %447 = vmatprep.subr.mxu0 0.0
    %448 = vmatpush1.msra.mxu0 %v416
    %449 = vmatprep.subr.mxu0 0.0
    %450 = vmatpush1.msra.mxu0 %v417
    %451 = vmatprep.subr.mxu0 0.0
    %452 = vmatpush1.msra.mxu0 %v418
    %453 = vmatprep.subr.mxu0 0.0
    %454 = vmatpush1.msra.mxu0 %v419
    %455 = vmatprep.subr.mxu0 0.0
    %456 = vmatpush1.msra.mxu0 %v420
    %457 = vmatprep.subr.mxu0 0.0
    %458 = vmatpush1.msra.mxu0 %v421
    %459 = vmatprep.subr.mxu0 0.0
    %460 = vmatpush1.msra.mxu0 %v422
    %461 = vmatprep.subr.mxu0 0.0
    %462 = vmatpush1.msra.mxu0 %v423
    %463 = vmatprep.subr.mxu0 0.0
    %464 = vmatpush1.msra.mxu0 0.0
    %465 = vmatprep.subr.mxu0 0.0
    %466 = vmatpush1.msra.mxu0 0.0
    %467 = vmatprep.subr.mxu0 0.0
    %468 = vmatpush1.msra.mxu0 0.0
    %469 = vmatprep.subr.mxu0 0.0
    %470 = vmatpush1.msra.mxu0 0.0
    %471 = vmatprep.subr.mxu0 0.0
    %472 = vmatpush1.msra.mxu0 0.0
    %473 = vmatprep.subr.mxu0 0.0
    %474 = vmatpush1.msra.mxu0 0.0
    %475 = vmatprep.subr.mxu0 0.0
    %476 = vmatpush1.msra.mxu0 0.0
    %477 = vmatprep.subr.mxu0 0.0
    %478 = vmatpush1.msra.mxu0 0.0
    %479 = vmatprep.subr.mxu0 0.0
    %480 = vmatpush1.msra.mxu0 0.0
    %481 = vmatprep.subr.mxu0 0.0
    %482 = vmatpush1.msra.mxu0 0.0
    %483 = vmatprep.subr.mxu0 0.0
    %484 = vmatpush1.msra.mxu0 0.0
    %485 = vmatprep.subr.mxu0 0.0
    %486 = vmatpush1.msra.mxu0 0.0
    %487 = vmatprep.subr.mxu0 0.0
    %488 = vmatpush1.msra.mxu0 0.0
    %489 = vmatprep.subr.mxu0 0.0
    %490 = vmatpush1.msra.mxu0 0.0
    %491 = vmatprep.subr.mxu0 0.0
    %492 = vmatpush1.msra.mxu0 0.0
    %493 = vmatprep.subr.mxu0 0.0
    %494 = vmatpush1.msra.mxu0 0.0
    %495 = vmatprep.mubr.f32.mxu0 0.0
    %496 = vmatmul.mubr.f32.gmra.mrb[0].mxu0 %v407
    %v497 = vpop.f32.mrb[0].mxu0
    %v498 = vadd.f32 %v429, %v497
    %v499 = vpop.f32.mrb[0].mxu0
    %500 = vdwg.mxu0
    %vm501 = vcmp.ge.f32.partialorder %v498, 0.0
    %v502 = vmul.f32 %v498, 0.001
    %v503 = vsel %vm501, %v498, %v502
    %v504 = vld [vmem:[#allocation11] sm:$0xff]
    %v505 = vld [vmem:[#allocation11 + $0x8] sm:$0xff]
    %v506 = vld [vmem:[#allocation11 + $0x10] sm:$0xff]
    %v507 = vld [vmem:[#allocation11 + $0x18] sm:$0xff]
    %v508 = vld [vmem:[#allocation11 + $0x20] sm:$0xff]
    %v509 = vld [vmem:[#allocation11 + $0x28] sm:$0xff]
    %v510 = vld [vmem:[#allocation11 + $0x30] sm:$0xff]
    %v511 = vld [vmem:[#allocation11 + $0x38] sm:$0xff]
    %v512 = vld [vmem:[#allocation11 + $0x40] sm:$0xff]
    %v513 = vld [vmem:[#allocation11 + $0x48] sm:$0xff]
    %v514 = vld [vmem:[#allocation11 + $0x50] sm:$0xff]
    %v515 = vld [vmem:[#allocation11 + $0x58] sm:$0xff]
    %v516 = vld [vmem:[#allocation11 + $0x60] sm:$0xff]
    %v517 = vld [vmem:[#allocation11 + $0x68] sm:$0xff]
    %v518 = vld [vmem:[#allocation11 + $0x70] sm:$0xff]
    %v519 = vld [vmem:[#allocation11 + $0x78] sm:$0xff]
    %v520 = vld [vmem:[%s10] sm:$0x1]
    %v522 = vlaneseq
    %v523 = vshrl.u32 %v522, 7
    %v524 = vsub.s32 0, %v523
    %v525 = vrot.slane %v520, %v524
    %527 = vmatprep.subr.mxu0 0.0
    %528 = vmatpush1.msra.mxu0 %v504
    %529 = vmatprep.subr.mxu0 0.0
    %530 = vmatpush1.msra.mxu0 %v505
    %531 = vmatprep.subr.mxu0 0.0
    %532 = vmatpush1.msra.mxu0 %v506
    %533 = vmatprep.subr.mxu0 0.0
    %534 = vmatpush1.msra.mxu0 %v507
    %535 = vmatprep.subr.mxu0 0.0
    %536 = vmatpush1.msra.mxu0 %v508
    %537 = vmatprep.subr.mxu0 0.0
    %538 = vmatpush1.msra.mxu0 %v509
    %539 = vmatprep.subr.mxu0 0.0
    %540 = vmatpush1.msra.mxu0 %v510
    %541 = vmatprep.subr.mxu0 0.0
    %542 = vmatpush1.msra.mxu0 %v511
    %543 = vmatprep.subr.mxu0 0.0
    %544 = vmatpush1.msra.mxu0 %v512
    %545 = vmatprep.subr.mxu0 0.0
    %546 = vmatpush1.msra.mxu0 %v513
    %547 = vmatprep.subr.mxu0 0.0
    %548 = vmatpush1.msra.mxu0 %v514
    %549 = vmatprep.subr.mxu0 0.0
    %550 = vmatpush1.msra.mxu0 %v515
    %551 = vmatprep.subr.mxu0 0.0
    %552 = vmatpush1.msra.mxu0 %v516
    %553 = vmatprep.subr.mxu0 0.0
    %554 = vmatpush1.msra.mxu0 %v517
    %555 = vmatprep.subr.mxu0 0.0
    %556 = vmatpush1.msra.mxu0 %v518
    %557 = vmatprep.subr.mxu0 0.0
    %558 = vmatpush1.msra.mxu0 %v519
    %559 = vmatprep.subr.mxu0 0.0
    %560 = vmatpush1.msra.mxu0 0.0
    %561 = vmatprep.subr.mxu0 0.0
    %562 = vmatpush1.msra.mxu0 0.0
    %563 = vmatprep.subr.mxu0 0.0
    %564 = vmatpush1.msra.mxu0 0.0
    %565 = vmatprep.subr.mxu0 0.0
    %566 = vmatpush1.msra.mxu0 0.0
    %567 = vmatprep.subr.mxu0 0.0
    %568 = vmatpush1.msra.mxu0 0.0
    %569 = vmatprep.subr.mxu0 0.0
    %570 = vmatpush1.msra.mxu0 0.0
    %571 = vmatprep.subr.mxu0 0.0
    %572 = vmatpush1.msra.mxu0 0.0
    %573 = vmatprep.subr.mxu0 0.0
    %574 = vmatpush1.msra.mxu0 0.0
    %575 = vmatprep.subr.mxu0 0.0
    %576 = vmatpush1.msra.mxu0 0.0
    %577 = vmatprep.subr.mxu0 0.0
    %578 = vmatpush1.msra.mxu0 0.0
    %579 = vmatprep.subr.mxu0 0.0
    %580 = vmatpush1.msra.mxu0 0.0
    %581 = vmatprep.subr.mxu0 0.0
    %582 = vmatpush1.msra.mxu0 0.0
    %583 = vmatprep.subr.mxu0 0.0
    %584 = vmatpush1.msra.mxu0 0.0
    %585 = vmatprep.subr.mxu0 0.0
    %586 = vmatpush1.msra.mxu0 0.0
    %587 = vmatprep.subr.mxu0 0.0
    %588 = vmatpush1.msra.mxu0 0.0
    %589 = vmatprep.subr.mxu0 0.0
    %590 = vmatpush1.msra.mxu0 0.0
    %591 = vmatprep.mubr.f32.mxu0 0.0
    %592 = vmatmul.mubr.f32.gmra.mrb[0].mxu0 %v503
    %v593 = vpop.f32.mrb[0].mxu0
    %v594 = vadd.f32 %v525, %v593
    %v595 = vpop.f32.mrb[0].mxu0
    %596 = vdwg.mxu0
    %vm597 = vcmp.ge.f32.partialorder %v594, 0.0
    %v598 = vmul.f32 %v594, 0.001
    %v599 = vsel %vm597, %v594, %v598
    %600 = vst [vmem:[#allocation13] sm:$0xff] %v599
    // Predicated region
    $region70: #{tpu_custom_call.1} parent=1 // pred_check
      _
    $region71: #{tpu_custom_call.1} parent=1 // pred_check_branch
      %602 = sbr.rel (0) target = $region73
    $region72: #{tpu_custom_call.1} parent=1 // pred_region
      %s604 = ssub.s32 128, 128
      %605 = vsyncadd [#allocation4], %s604
      %s607 = sshll.u32 [#allocation13], 4
      %s608 = int_to_ptr.vmem [resolvable:$true] %s607
      %610 = dma.vmem_to_hbm [thread:$0]  %s608, 128, %s11, [#allocation4]
    $region73: #{tpu_custom_call.1} parent=1 // pred_fallthru
      _
    // Predicated region
    $region74: #{tpu_custom_call.1} parent=1 // pred_check
      _
    $region75: #{tpu_custom_call.1} parent=1 // pred_check_branch
      %612 = sbr.rel (0) target = $region77
    $region76: #{tpu_custom_call.1} parent=1 // pred_region
      %613 = dma.done [#allocation4], 128
    $region77: #{tpu_custom_call.1} parent=1 // pred_fallthru
      _
    %614 = vsyncpa [#allocation3], 1
    %615 = vsyncpa [#allocation6], 1
    %616 = vsyncpa [#allocation9], 1
    %617 = vsyncpa [#allocation12], 1
    %618 = vsyncpa [#allocation4], 1

</llo_original>
